<compile_context>
chip_gen: v5e
topology: v5e:2x2
jax: 0.10.0
libtpu: 0.0.40
codegen_flags: <defaults>
</compile_context>

<pallas_src>
import functools

import jax
import jax.numpy as jnp
from jax.experimental import pallas as pl
from jax.experimental.pallas import tpu as pltpu

_LANE = 128
_SUBLANE = 8
_UNIT = _SUBLANE * _LANE          # 1024 f32 = one full vreg of output
_MAX_UNITS_PER_TILE = 128         # 128 * 1024 lanes per grid step (2.5 MiB of X at D=5)


def _cdiv(a, b):
    return -(-a // b)


def _poly_matvec_kernel(w_ref, x_ref, o_ref):
    """One N-tile of y = X @ params, fully vreg-dense on the VPU.

    w_ref: (D,)            f32 SMEM  -- model parameters (scalar broadcasts)
    x_ref: (D, BU, 8, 128) f32 VMEM  -- BU*1024 columns of X^T, stacked per feature
    o_ref: (BU, 8, 128)    f32 VMEM  -- matching slab of y (unmasked stores)
    """
    d_total = x_ref.shape[0]
    acc = x_ref[0] * w_ref[0]
    for d in range(1, d_total):                 # unrolled: D is tiny and static
        acc = acc + x_ref[d] * w_ref[d]
    o_ref[...] = acc


@functools.partial(jax.jit, static_argnames=("max_units_per_tile",))
def linear_model_forward(X, params, *, max_units_per_tile=_MAX_UNITS_PER_TILE):
    """Equivalent of LinearModel.forward: torch.matmul(X, params).

    X: (N, degree+1) float32
    params: (degree+1,) float32
    returns: (N,) float32
    """
    N, D = X.shape
    X = X.astype(jnp.float32)
    params = params.astype(jnp.float32)

    # --- tile sizing (static Python ints under jit) -------------------------
    n_units = _cdiv(N, _UNIT)                       # 1024-lane units of y
    n_tiles = max(1, _cdiv(n_units, max_units_per_tile))
    if n_units >= 2:
        n_tiles = max(2, n_tiles)                   # >=2 tiles so both v7x TCs work
    bu = _cdiv(n_units, n_tiles)                    # units per tile (<= max)
    n_tiles = _cdiv(n_units, bu)
    units_pad = n_tiles * bu                        # pads < n_tiles extra units
    n_pad = units_pad * _UNIT

    # --- layout plumbing: one fused transpose+pad pass, then free reshapes --
    x_t = jnp.pad(X.T, ((0, 0), (0, n_pad - N)))            # (D, n_pad)
    x4 = x_t.reshape(D, units_pad, _SUBLANE, _LANE)          # contiguity-preserving

    out = pl.pallas_call(
        _poly_matvec_kernel,
        out_shape=jax.ShapeDtypeStruct((units_pad, _SUBLANE, _LANE), jnp.float32),
        grid=(n_tiles,),
        in_specs=[
            pl.BlockSpec(memory_space=pltpu.MemorySpace.SMEM),              # params
            pl.BlockSpec((D, bu, _SUBLANE, _LANE), lambda i: (0, i, 0, 0)),  # X^T tiles
        ],
        out_specs=pl.BlockSpec((bu, _SUBLANE, _LANE), lambda i: (i, 0, 0)),
        compiler_params=pltpu.CompilerParams(
            dimension_semantics=("parallel",),      # independent N-tiles
            vmem_limit_bytes=32 * 1024 * 1024,      # ample: ~6-7 MiB actually used
        ),
    )(params, x4)

    y = out.reshape(n_pad)                          # contiguity-preserving
    return y if n_pad == N else y[:N]


if __name__ == "__main__":
    degree = 4          # params has degree + 1 = 5 entries
    batch = 8

    key = jax.random.PRNGKey(0)
    k_x, k_p, k_big = jax.random.split(key, 3)

    # Deterministic "torch.randn(degree + 1)"-style parameter init.
    params = jax.random.normal(k_p, (degree + 1,), dtype=jnp.float32)

    # Example input: rows of polynomial features [1, x, x^2, ..., x^degree].
    x_raw = jax.random.normal(k_x, (batch,), dtype=jnp.float32)
    X = jnp.stack([x_raw ** i for i in range(degree + 1)], axis=1)  # (batch, degree+1)

    y = linear_model_forward(X, params)
    jax.block_until_ready(y)
    y_ref = X @ params
    assert y.shape == (batch,)
    assert jnp.allclose(y, y_ref, atol=1e-5, rtol=1e-5)

    # Second check exercising the multi-tile / padded path (still tiny).
    X_big = jax.random.normal(k_big, (3000, degree + 1), dtype=jnp.float32)
    y_big = linear_model_forward(X_big, params)
    jax.block_until_ready(y_big)
    assert y_big.shape == (3000,)
    assert jnp.allclose(y_big, X_big @ params, atol=1e-4, rtol=1e-4)

    print("KERNEL_OK")
</pallas_src>

<mosaic_0001>
module attributes {stable_mosaic.version = 11 : i64} {
  func.func @_poly_matvec_kernel(%arg0: i32, %arg1: memref<5xf32, #tpu.memory_space<smem>>, %arg2: memref<5x1x8x128xf32, #tpu.memory_space<vmem>>, %arg3: memref<1x8x128xf32, #tpu.memory_space<vmem>>) attributes {dimension_semantics = [#tpu.dimension_semantics<parallel>], iteration_bounds = array<i64: 1>, scalar_prefetch = 0 : i64, scratch_operands = 0 : i64, tpu.core_type = #tpu.core_type<tc>, window_params = [{transform_indices = @transform_0, window_bounds = array<i64: 5>}, {transform_indices = @transform_1, window_bounds = array<i64: 5, 1, 8, 128>}, {transform_indices = @transform_2, window_bounds = array<i64: 1, 8, 128>}]} {
    %c0 = arith.constant 0 : index
    %c0_0 = arith.constant 0 : index
    %c0_1 = arith.constant 0 : index
    %c0_2 = arith.constant 0 : index
    %0 = vector.load %arg2[%c0, %c0_0, %c0_1, %c0_2] : memref<5x1x8x128xf32, #tpu.memory_space<vmem>>, vector<1x1x8x128xf32>
    %1 = vector.shape_cast %0 : vector<1x1x8x128xf32> to vector<1x8x128xf32>
    %c0_3 = arith.constant 0 : index
    %2 = memref.load %arg1[%c0_3] : memref<5xf32, #tpu.memory_space<smem>>
    %3 = vector.broadcast %2 : f32 to vector<1x8x128xf32>
    %4 = arith.mulf %1, %3 : vector<1x8x128xf32>
    %c1 = arith.constant 1 : index
    %c0_4 = arith.constant 0 : index
    %c0_5 = arith.constant 0 : index
    %c0_6 = arith.constant 0 : index
    %5 = vector.load %arg2[%c1, %c0_4, %c0_5, %c0_6] : memref<5x1x8x128xf32, #tpu.memory_space<vmem>>, vector<1x1x8x128xf32>
    %6 = vector.shape_cast %5 : vector<1x1x8x128xf32> to vector<1x8x128xf32>
    %c1_7 = arith.constant 1 : index
    %7 = memref.load %arg1[%c1_7] : memref<5xf32, #tpu.memory_space<smem>>
    %8 = vector.broadcast %7 : f32 to vector<1x8x128xf32>
    %9 = arith.mulf %6, %8 : vector<1x8x128xf32>
    %10 = arith.addf %4, %9 : vector<1x8x128xf32>
    %c2 = arith.constant 2 : index
    %c0_8 = arith.constant 0 : index
    %c0_9 = arith.constant 0 : index
    %c0_10 = arith.constant 0 : index
    %11 = vector.load %arg2[%c2, %c0_8, %c0_9, %c0_10] : memref<5x1x8x128xf32, #tpu.memory_space<vmem>>, vector<1x1x8x128xf32>
    %12 = vector.shape_cast %11 : vector<1x1x8x128xf32> to vector<1x8x128xf32>
    %c2_11 = arith.constant 2 : index
    %13 = memref.load %arg1[%c2_11] : memref<5xf32, #tpu.memory_space<smem>>
    %14 = vector.broadcast %13 : f32 to vector<1x8x128xf32>
    %15 = arith.mulf %12, %14 : vector<1x8x128xf32>
    %16 = arith.addf %10, %15 : vector<1x8x128xf32>
    %c3 = arith.constant 3 : index
    %c0_12 = arith.constant 0 : index
    %c0_13 = arith.constant 0 : index
    %c0_14 = arith.constant 0 : index
    %17 = vector.load %arg2[%c3, %c0_12, %c0_13, %c0_14] : memref<5x1x8x128xf32, #tpu.memory_space<vmem>>, vector<1x1x8x128xf32>
    %18 = vector.shape_cast %17 : vector<1x1x8x128xf32> to vector<1x8x128xf32>
    %c3_15 = arith.constant 3 : index
    %19 = memref.load %arg1[%c3_15] : memref<5xf32, #tpu.memory_space<smem>>
    %20 = vector.broadcast %19 : f32 to vector<1x8x128xf32>
    %21 = arith.mulf %18, %20 : vector<1x8x128xf32>
    %22 = arith.addf %16, %21 : vector<1x8x128xf32>
    %c4 = arith.constant 4 : index
    %c0_16 = arith.constant 0 : index
    %c0_17 = arith.constant 0 : index
    %c0_18 = arith.constant 0 : index
    %23 = vector.load %arg2[%c4, %c0_16, %c0_17, %c0_18] : memref<5x1x8x128xf32, #tpu.memory_space<vmem>>, vector<1x1x8x128xf32>
    %24 = vector.shape_cast %23 : vector<1x1x8x128xf32> to vector<1x8x128xf32>
    %c4_19 = arith.constant 4 : index
    %25 = memref.load %arg1[%c4_19] : memref<5xf32, #tpu.memory_space<smem>>
    %26 = vector.broadcast %25 : f32 to vector<1x8x128xf32>
    %27 = arith.mulf %24, %26 : vector<1x8x128xf32>
    %28 = arith.addf %22, %27 : vector<1x8x128xf32>
    %c0_20 = arith.constant 0 : index
    %c0_21 = arith.constant 0 : index
    %c0_22 = arith.constant 0 : index
    %29 = vector.load %arg3[%c0_20, %c0_21, %c0_22] : memref<1x8x128xf32, #tpu.memory_space<vmem>>, vector<1x8x128xf32>
    tpu.vector_store %arg3[%c0_20, %c0_21, %c0_22], %28 {strides = array<i32>} : memref<1x8x128xf32, #tpu.memory_space<vmem>>, vector<1x8x128xf32>,
    return
  }
  func.func @transform_0(%arg0: i32) -> i32 {
    %c0_i32 = arith.constant 0 : i32
    %c0_i32_0 = arith.constant 0 : i32
    return %c0_i32 : i32
  }
  func.func @transform_1(%arg0: i32) -> (i32, i32, i32, i32) {
    %c0_i32 = arith.constant 0 : i32
    %c0_i32_0 = arith.constant 0 : i32
    %c0_i32_1 = arith.constant 0 : i32
    %c0_i32_2 = arith.constant 0 : i32
    return %c0_i32, %arg0, %c0_i32_0, %c0_i32_1 : i32, i32, i32, i32
  }
  func.func @transform_2(%arg0: i32) -> (i32, i32, i32) {
    %c0_i32 = arith.constant 0 : i32
    %c0_i32_0 = arith.constant 0 : i32
    %c0_i32_1 = arith.constant 0 : i32
    return %arg0, %c0_i32, %c0_i32_0 : i32, i32, i32
  }
}

</mosaic_0001>

<llo_original>
// kernel: linear_model_forward.1
$region0: #{linear_model_forward.1}
  #allocation0 [shape = 'u32[]', space=smem, size = 0x4, offset = 0x4, fixed_abs, tag = 'smem constant byte address 0x4 - core index']
  #allocation1 [shape = 'u32[72,128]{1,0:T(1,128)}', space=vmem, size = 0x9000, scoped, tag = 'internal scratch']
  %s0 = inlined_call_operand.vmem [shape: f32[5], index: 0, kind: input, shape index: {}]
  %s1 = inlined_call_operand.vmem [shape: f32[5,1,8,128], index: 1, kind: input, shape index: {}]
  %s2 = inlined_call_operand.vmem [shape: f32[1,8,128], index: 2, kind: output, shape index: {}]
  %s3 = sld [smem:[#allocation0]]
  $region22: #{linear_model_forward.1} parent=0
    _
  %s5 = ssub.s32 1, %s3
  %s6 = scalar_select 0, %s5, %s3
  $region1: #{linear_model_forward.1} parent=0
    #allocation2 [shape = 'u8[512]{0}', space=smem, size = 0x200, scoped, tag = 'input window, operand 0, single buffered']
    #allocation3 [shape = 's32[1]{0}', space=sflag, size = 0x4, scoped, tag = 'scoped memory for linear_model_forward.1']
    %7 = vsyncpa [#allocation3], 0
    // Predicated region
    $region2: #{linear_model_forward.1} parent=1 // pred_check
      _
    $region3: #{linear_model_forward.1} parent=1 // pred_check_branch
      %9 = sbr.rel (0) target = $region5
    $region4: #{linear_model_forward.1} parent=1 // pred_region
      %11 = vsyncadd [#allocation3], 0
      %s13 = sshll.u32 %s0, 4
      %s14 = int_to_ptr.vmem [resolvable:$true] %s13
      %16 = dma.vmem_to_smem %s14, 16, [#allocation2], [#allocation3]
    $region5: #{linear_model_forward.1} parent=1 // pred_fallthru
      _
    // Predicated region
    $region6: #{linear_model_forward.1} parent=1 // pred_check
      _
    $region7: #{linear_model_forward.1} parent=1 // pred_check_branch
      %18 = sbr.rel (0) target = $region9
    $region8: #{linear_model_forward.1} parent=1 // pred_region
      _
    $region9: #{linear_model_forward.1} parent=1 // pred_fallthru
      _
    // Predicated region
    $region10: #{linear_model_forward.1} parent=1 // pred_check
      _
    $region11: #{linear_model_forward.1} parent=1 // pred_check_branch
      %20 = sbr.rel (0) target = $region13
    $region12: #{linear_model_forward.1} parent=1 // pred_region
      %22 = dma.done [#allocation3], 16
    $region13: #{linear_model_forward.1} parent=1 // pred_fallthru
      _
    %23 = sfence
    %v24 = vld [vmem:[%s1] sm:$0xff]
    %s25 = sld [smem:[#allocation2]]
    %v26 = vstv %s25
    %v27 = vmul.f32 %v24, %v26
    %s28 = scalar_lea.vmem %s1, 8
    %v29 = vld [vmem:[%s28] sm:$0xff]
    %s30 = sld [smem:[#allocation2 + $0x1]]
    %v31 = vstv %s30
    %v32 = vmul.f32 %v29, %v31
    %v33 = vadd.f32 %v27, %v32
    %s34 = scalar_lea.vmem %s1, 16
    %v35 = vld [vmem:[%s34] sm:$0xff]
    %s36 = sld [smem:[#allocation2 + $0x2]]
    %v37 = vstv %s36
    %v38 = vmul.f32 %v35, %v37
    %v39 = vadd.f32 %v33, %v38
    %s40 = scalar_lea.vmem %s1, 24
    %v41 = vld [vmem:[%s40] sm:$0xff]
    %s42 = sld [smem:[#allocation2 + $0x3]]
    %v43 = vstv %s42
    %v44 = vmul.f32 %v41, %v43
    %v45 = vadd.f32 %v39, %v44
    %s46 = scalar_lea.vmem %s1, 32
    %v47 = vld [vmem:[%s46] sm:$0xff]
    %s48 = sld [smem:[#allocation2 + $0x4]]
    %v49 = vstv %s48
    %v50 = vmul.f32 %v47, %v49
    %v51 = vadd.f32 %v45, %v50
    %52 = vst [vmem:[%s2] sm:$0xff] %v51
    // Predicated region
    $region14: #{linear_model_forward.1} parent=1 // pred_check
      _
    $region15: #{linear_model_forward.1} parent=1 // pred_check_branch
      %54 = sbr.rel (0) target = $region17
    $region16: #{linear_model_forward.1} parent=1 // pred_region
      _
    $region17: #{linear_model_forward.1} parent=1 // pred_fallthru
      _
    // Predicated region
    $region18: #{linear_model_forward.1} parent=1 // pred_check
      _
    $region19: #{linear_model_forward.1} parent=1 // pred_check_branch
      %56 = sbr.rel (0) target = $region21
    $region20: #{linear_model_forward.1} parent=1 // pred_region
      _
    $region21: #{linear_model_forward.1} parent=1 // pred_fallthru
      _
    %57 = vsyncpa [#allocation3], 1

</llo_original>
